<compile_context>
chip_gen: v5e
topology: v5e:2x2
jax: 0.10.0
libtpu: 0.0.40
codegen_flags: <defaults>
</compile_context>

<pallas_src>
import jax
import jax.numpy as jnp
from jax.experimental import pallas as pl
from jax.experimental.pallas import tpu as pltpu


def _vmem_limit_bytes():
    """Raise the scoped-VMEM ceiling above the 16/32 MiB defaults, staying
    safely below physical capacity (v5e/v6e: 128 MiB; v7x: 64 MiB per TC)."""
    try:
        kind = jax.devices()[0].device_kind.lower()
    except Exception:
        return None
    if "v7" in kind:
        return 48 * 1024 * 1024
    if "v5" in kind or "v6" in kind:
        return 100 * 1024 * 1024
    return None


def conv_block_forward(x_nchw, weight_oihw, bias, gamma, beta, *,
                       kernel_size, tile_rows=512, cout_block=None,
                       mxu_dtype=jnp.bfloat16):
    # `bias` is intentionally unused: training-mode BN cancels a per-channel
    # constant added before it (kept in the signature for module parity).
    del bias
    # TODO(synk): BatchNorm2d running_mean/running_var (momentum) buffer
    # updates are not emitted; the training-mode forward output does not
    # depend on them.

    N, Cin, H, W = x_nchw.shape
    Cout = weight_oihw.shape[0]
    K = kernel_size
    p = K // 2
    Hp, Wp = H + 2 * p, W + 2 * p
    kkc = K * K * Cin
    halo = p * Wp + p                     # max |flattened tap shift|
    count = N * H * W                     # BN statistics population size

    if cout_block is None:
        cout_block = Cout if Cout <= 256 else 256
    assert Cout % cout_block == 0, (Cout, cout_block)
    assert tile_rows % 128 == 0, tile_rows

    rows_pad = N * Hp * Wp                # flattened padded-grid positions
    n_tiles = -(-rows_pad // tile_rows)
    rows_total = n_tiles * tile_rows
    t_win = tile_rows + 2 * halo

    # ---- wrapper glue: pad once, build overlapping halo windows ------------
    # (single light pass over the input; NOT a K^2-duplicated im2col slab)
    xcf = jnp.transpose(x_nchw, (1, 0, 2, 3))                    # (Cin,N,H,W)
    xpad = jnp.pad(xcf, ((0, 0), (0, 0), (p, p), (p, p)))        # (Cin,N,Hp,Wp)
    flat = xpad.reshape(Cin, rows_pad).astype(mxu_dtype)
    flat = jnp.pad(flat, ((0, 0), (halo, rows_total - rows_pad + halo)))
    idx = (jnp.arange(n_tiles) * tile_rows)[:, None] + jnp.arange(t_win)[None, :]
    windows = jnp.transpose(flat[:, idx], (1, 0, 2))             # (nt,Cin,t_win)

    # Valid-position mask: interior of each image (pad ring and the tail that
    # rounds rows up to a tile multiple are excluded from the BN statistics).
    r = jnp.arange(rows_total)
    hh = (r // Wp) % Hp
    ww = r % Wp
    valid = (r < rows_pad) & (hh >= p) & (hh < p + H) & (ww >= p) & (ww < p + W)
    mask = valid.astype(jnp.float32).reshape(n_tiles, 1, tile_rows)

    # Folded conv weights: OIHW -> (Cout, K*K*Cin), tap-major (kh, kw, cin).
    w2 = jnp.transpose(weight_oihw, (0, 2, 3, 1)).reshape(Cout, kkc)
    w2 = w2.astype(mxu_dtype)

    vmem_limit = _vmem_limit_bytes()
    grid = (Cout // cout_block, n_tiles)

    # ---- pass 1: conv tiles (streamed) + per-channel sum / sum-of-squares --
    def conv_stats_kernel(win_ref, msk_ref, w_ref, y_ref, sum_ref, sq_ref,
                          patch_ref):
        i = pl.program_id(1)

        @pl.when(i == 0)
        def _():
            sum_ref[...] = jnp.zeros_like(sum_ref)
            sq_ref[...] = jnp.zeros_like(sq_ref)

        # In-kernel im2col: K*K statically shifted slices of the halo window.
        for kh in range(K):
            for kw in range(K):
                t = kh * K + kw
                off = halo + (kh - p) * Wp + (kw - p)
                patch_ref[t * Cin:(t + 1) * Cin, :] = (
                    win_ref[0, :, off:off + tile_rows])

        # Single folded MXU matmul (bf16 operands, f32 accumulation).
        acc = jnp.dot(w_ref[...], patch_ref[...],
                      preferred_element_type=jnp.float32)

        m = msk_ref[0]                                   # (1, tile_rows)
        am = acc * m
        # One-pass BN stats.  NOTE: E[x^2]-E[x]^2 in f32; conv outputs are
        # near zero-mean so cancellation is benign here.  Use a pilot-mean /
        # Welford update if |mean| >> std in your regime.
        sum_ref[...] += jnp.sum(am, axis=1, keepdims=True)
        sq_ref[...] += jnp.sum(am * acc, axis=1, keepdims=True)

        y_ref[...] = acc                                 # lane-dense, streamed

    y_flat, s, q = pl.pallas_call(
        conv_stats_kernel,
        out_shape=(
            jax.ShapeDtypeStruct((Cout, rows_total), jnp.float32),
            jax.ShapeDtypeStruct((Cout, 1), jnp.float32),
            jax.ShapeDtypeStruct((Cout, 1), jnp.float32),
        ),
        grid_spec=pltpu.PrefetchScalarGridSpec(
            num_scalar_prefetch=0,
            grid=grid,
            in_specs=[
                pl.BlockSpec((1, Cin, t_win), lambda c, i: (i, 0, 0)),
                pl.BlockSpec((1, 1, tile_rows), lambda c, i: (i, 0, 0)),
                # Grid-invariant along the row axis (pl.Buffered(1) would
                # single-buffer it to reclaim VMEM on v7x).
                pl.BlockSpec((cout_block, kkc), lambda c, i: (c, 0)),
            ],
            out_specs=[
                pl.BlockSpec((cout_block, tile_rows), lambda c, i: (c, i)),
                pl.BlockSpec((cout_block, 1), lambda c, i: (c, 0)),
                pl.BlockSpec((cout_block, 1), lambda c, i: (c, 0)),
            ],
            scratch_shapes=[pltpu.VMEM((kkc, tile_rows), mxu_dtype)],
        ),
        compiler_params=pltpu.CompilerParams(
            dimension_semantics=("parallel", "arbitrary"),
            vmem_limit_bytes=vmem_limit,
        ),
    )(windows, mask, w2)

    # ---- tiny per-channel BN constants (Cout elements, plain XLA) ----------
    eps = 1e-5
    mean = s / count
    var = q / count - mean * mean
    scale = gamma.reshape(Cout, 1).astype(jnp.float32) * jax.lax.rsqrt(var + eps)
    shift = beta.reshape(Cout, 1).astype(jnp.float32) - mean * scale

    # ---- pass 2: streamed BN affine + ReLU ----------------------------------
    def bn_relu_kernel(y_ref, sc_ref, sh_ref, o_ref):
        o_ref[...] = jnp.maximum(y_ref[...] * sc_ref[...] + sh_ref[...], 0.0)

    out_flat = pl.pallas_call(
        bn_relu_kernel,
        out_shape=jax.ShapeDtypeStruct((Cout, rows_total), jnp.float32),
        grid_spec=pltpu.PrefetchScalarGridSpec(
            num_scalar_prefetch=0,
            grid=grid,
            in_specs=[
                pl.BlockSpec((cout_block, tile_rows), lambda c, i: (c, i)),
                pl.BlockSpec((cout_block, 1), lambda c, i: (c, 0)),
                pl.BlockSpec((cout_block, 1), lambda c, i: (c, 0)),
            ],
            out_specs=pl.BlockSpec((cout_block, tile_rows), lambda c, i: (c, i)),
        ),
        compiler_params=pltpu.CompilerParams(
            dimension_semantics=("parallel", "parallel"),
            vmem_limit_bytes=vmem_limit,
        ),
    )(y_flat, scale, shift)

    # ---- wrapper glue: crop the pad ring, back to NCHW for module parity ---
    out = out_flat[:, :rows_pad].reshape(Cout, N, Hp, Wp)[:, :, p:p + H, p:p + W]
    return jnp.transpose(out, (1, 0, 2, 3)).astype(x_nchw.dtype)


# -----------------------------------------------------------------------------
# Pure-JAX reference of the same forward pass (keeps the conv bias, which
# training-mode BN cancels -> also validates the bias-drop optimization).
# -----------------------------------------------------------------------------
def reference_forward(x_nchw, weight_oihw, bias, gamma, beta, kernel_size):
    pad = kernel_size // 2
    y = jax.lax.conv_general_dilated(
        x_nchw, weight_oihw, (1, 1), [(pad, pad), (pad, pad)],
        dimension_numbers=("NCHW", "OIHW", "NCHW"),
    )
    y = y + bias.reshape(1, -1, 1, 1)
    mean = jnp.mean(y, axis=(0, 2, 3), keepdims=True)
    var = jnp.mean(jnp.square(y - mean), axis=(0, 2, 3), keepdims=True)
    y = (y - mean) * gamma.reshape(1, -1, 1, 1) / jnp.sqrt(var + 1e-5) \
        + beta.reshape(1, -1, 1, 1)
    return jnp.maximum(y, 0.0)


if __name__ == "__main__":
    # ConvBlock(in_channels=4, out_channels=8, kernel_size=3,
    #           activation=nn.ReLU(), batch_norm=True), module in training mode.
    N, Cin, H, W = 2, 4, 16, 16
    Cout, K = 8, 3

    key = jax.random.PRNGKey(0)
    kx, kw, kb, kg, kbe = jax.random.split(key, 5)

    x = jax.random.normal(kx, (N, Cin, H, W), dtype=jnp.float32)
    fan_in = Cin * K * K
    bound = 1.0 / jnp.sqrt(fan_in)
    weight = jax.random.uniform(kw, (Cout, Cin, K, K), jnp.float32, -bound, bound)
    bias = jax.random.uniform(kb, (Cout,), jnp.float32, -bound, bound)
    gamma = jax.random.uniform(kg, (Cout,), jnp.float32, 0.5, 1.5)
    beta = 0.1 * jax.random.normal(kbe, (Cout,), jnp.float32)

    fwd = jax.jit(conv_block_forward,
                  static_argnames=("kernel_size", "tile_rows", "cout_block",
                                   "mxu_dtype"))

    # tile_rows=256 -> 3 row tiles: exercises cross-tile stats accumulation and
    # the pl.when init path.  Production sizes would use 512-2048 (see notes).
    out = fwd(x, weight, bias, gamma, beta, kernel_size=K, tile_rows=256)
    out = jax.block_until_ready(out)
    assert out.shape == (N, Cout, H, W), out.shape

    # Tight check: reference fed bf16-rounded operands (the kernel's MXU
    # operand precision); everything downstream is f32 in both paths.
    xb = x.astype(jnp.bfloat16).astype(jnp.float32)
    wb = weight.astype(jnp.bfloat16).astype(jnp.float32)
    ref_b = reference_forward(xb, wb, bias, gamma, beta, K)
    err_b = float(jnp.max(jnp.abs(out - ref_b)))
    assert jnp.allclose(out, ref_b, rtol=1e-3, atol=1e-3), err_b

    # Loose sanity check vs the exact f32 reference (difference is purely the
    # bf16 rounding of the matmul operands).
    ref = reference_forward(x, weight, bias, gamma, beta, K)
    err = float(jnp.max(jnp.abs(out - ref)))
    assert jnp.allclose(out, ref, rtol=1e-1, atol=2.5e-1), err

    print("KERNEL_OK")
</pallas_src>

<mosaic_0001>
module attributes {stable_mosaic.version = 11 : i64} {
  func.func @bn_relu_kernel(%arg0: i32, %arg1: i32, %arg2: memref<8x256xf32, #tpu.memory_space<vmem>>, %arg3: memref<8x1xf32, #tpu.memory_space<vmem>>, %arg4: memref<8x1xf32, #tpu.memory_space<vmem>>, %arg5: memref<8x256xf32, #tpu.memory_space<vmem>>) attributes {dimension_semantics = [#tpu.dimension_semantics<parallel>, #tpu.dimension_semantics<parallel>], iteration_bounds = array<i64: 1, 3>, scalar_prefetch = 0 : i64, scratch_operands = 0 : i64, tpu.core_type = #tpu.core_type<tc>, window_params = [{transform_indices = @transform_0, window_bounds = array<i64: 8, 256>}, {transform_indices = @transform_1, window_bounds = array<i64: 8, 1>}, {transform_indices = @transform_2, window_bounds = array<i64: 8, 1>}, {transform_indices = @transform_3, window_bounds = array<i64: 8, 256>}]} {
    %c0 = arith.constant 0 : index
    %c0_0 = arith.constant 0 : index
    %0 = vector.load %arg2[%c0, %c0_0] : memref<8x256xf32, #tpu.memory_space<vmem>>, vector<8x256xf32>
    %c0_1 = arith.constant 0 : index
    %c0_2 = arith.constant 0 : index
    %1 = vector.load %arg3[%c0_1, %c0_2] : memref<8x1xf32, #tpu.memory_space<vmem>>, vector<8x1xf32>
    %2 = vector.broadcast %1 : vector<8x1xf32> to vector<8x256xf32>
    %3 = arith.mulf %0, %2 : vector<8x256xf32>
    %c0_3 = arith.constant 0 : index
    %c0_4 = arith.constant 0 : index
    %4 = vector.load %arg4[%c0_3, %c0_4] : memref<8x1xf32, #tpu.memory_space<vmem>>, vector<8x1xf32>
    %5 = vector.broadcast %4 : vector<8x1xf32> to vector<8x256xf32>
    %6 = arith.addf %3, %5 : vector<8x256xf32>
    %cst = arith.constant 0.000000e+00 : f32
    %7 = vector.broadcast %cst : f32 to vector<8x256xf32>
    %8 = arith.maximumf %6, %7 : vector<8x256xf32>
    %c0_5 = arith.constant 0 : index
    %c0_6 = arith.constant 0 : index
    %9 = vector.load %arg5[%c0_5, %c0_6] : memref<8x256xf32, #tpu.memory_space<vmem>>, vector<8x256xf32>
    tpu.vector_store %arg5[%c0_5, %c0_6], %8 {strides = array<i32>} : memref<8x256xf32, #tpu.memory_space<vmem>>, vector<8x256xf32>,
    return
  }
  func.func @transform_0(%arg0: i32, %arg1: i32) -> (i32, i32) {
    %c0_i32 = arith.constant 0 : i32
    return %arg0, %arg1 : i32, i32
  }
  func.func @transform_1(%arg0: i32, %arg1: i32) -> (i32, i32) {
    %c0_i32 = arith.constant 0 : i32
    %c0_i32_0 = arith.constant 0 : i32
    return %arg0, %c0_i32 : i32, i32
  }
  func.func @transform_2(%arg0: i32, %arg1: i32) -> (i32, i32) {
    %c0_i32 = arith.constant 0 : i32
    %c0_i32_0 = arith.constant 0 : i32
    return %arg0, %c0_i32 : i32, i32
  }
  func.func @transform_3(%arg0: i32, %arg1: i32) -> (i32, i32) {
    %c0_i32 = arith.constant 0 : i32
    return %arg0, %arg1 : i32, i32
  }
}

module attributes {stable_mosaic.version = 11 : i64} {
  func.func @conv_stats_kernel(%arg0: i32, %arg1: i32, %arg2: memref<1x4x294xbf16, #tpu.memory_space<vmem>>, %arg3: memref<1x1x256xf32, #tpu.memory_space<vmem>>, %arg4: memref<8x36xbf16, #tpu.memory_space<vmem>>, %arg5: memref<8x256xf32, #tpu.memory_space<vmem>>, %arg6: memref<8x1xf32, #tpu.memory_space<vmem>>, %arg7: memref<8x1xf32, #tpu.memory_space<vmem>>, %arg8: memref<36x256xbf16, #tpu.memory_space<vmem>>) attributes {dimension_semantics = [#tpu.dimension_semantics<parallel>, #tpu.dimension_semantics<arbitrary>], iteration_bounds = array<i64: 1, 3>, scalar_prefetch = 0 : i64, scratch_operands = 1 : i64, tpu.core_type = #tpu.core_type<tc>, window_params = [{transform_indices = @transform_0, window_bounds = array<i64: 1, 4, 294>}, {transform_indices = @transform_1, window_bounds = array<i64: 1, 1, 256>}, {transform_indices = @transform_2, window_bounds = array<i64: 8, 36>}, {transform_indices = @transform_3, window_bounds = array<i64: 8, 256>}, {transform_indices = @transform_4, window_bounds = array<i64: 8, 1>}, {transform_indices = @transform_5, window_bounds = array<i64: 8, 1>}]} {
    %c0_i32 = arith.constant 0 : i32
    %0 = arith.cmpi eq, %arg1, %c0_i32 : i32
    %1 = arith.extui %0 : i1 to i32
    %c0_i32_0 = arith.constant 0 : i32
    %2 = arith.cmpi ne, %1, %c0_i32_0 : i32
    scf.if %2 {
      %cst_49 = arith.constant 0.000000e+00 : f32
      %49 = vector.broadcast %cst_49 : f32 to vector<8x1xf32>
      %c0_50 = arith.constant 0 : index
      %c0_51 = arith.constant 0 : index
      %50 = vector.load %arg6[%c0_50, %c0_51] : memref<8x1xf32, #tpu.memory_space<vmem>>, vector<8x1xf32>
      tpu.vector_store %arg6[%c0_50, %c0_51], %49 {strides = array<i32>} : memref<8x1xf32, #tpu.memory_space<vmem>>, vector<8x1xf32>,
      %cst_52 = arith.constant 0.000000e+00 : f32
      %51 = vector.broadcast %cst_52 : f32 to vector<8x1xf32>
      %c0_53 = arith.constant 0 : index
      %c0_54 = arith.constant 0 : index
      %52 = vector.load %arg7[%c0_53, %c0_54] : memref<8x1xf32, #tpu.memory_space<vmem>>, vector<8x1xf32>
      tpu.vector_store %arg7[%c0_53, %c0_54], %51 {strides = array<i32>} : memref<8x1xf32, #tpu.memory_space<vmem>>, vector<8x1xf32>,
    } else {
    }
    %c0 = arith.constant 0 : index
    %c0_1 = arith.constant 0 : index
    %c0_2 = arith.constant 0 : index
    %3 = vector.load %arg2[%c0, %c0_1, %c0_2] : memref<1x4x294xbf16, #tpu.memory_space<vmem>>, vector<1x4x256xbf16>
    %4 = vector.shape_cast %3 : vector<1x4x256xbf16> to vector<4x256xbf16>
    %c0_3 = arith.constant 0 : index
    %c0_4 = arith.constant 0 : index
    %5 = vector.load %arg8[%c0_3, %c0_4] : memref<36x256xbf16, #tpu.memory_space<vmem>>, vector<4x256xbf16>
    tpu.vector_store %arg8[%c0_3, %c0_4], %4 {strides = array<i32>} : memref<36x256xbf16, #tpu.memory_space<vmem>>, vector<4x256xbf16>,
    %c0_5 = arith.constant 0 : index
    %c0_6 = arith.constant 0 : index
    %c1 = arith.constant 1 : index
    %6 = vector.load %arg2[%c0_5, %c0_6, %c1] : memref<1x4x294xbf16, #tpu.memory_space<vmem>>, vector<1x4x256xbf16>
    %7 = vector.shape_cast %6 : vector<1x4x256xbf16> to vector<4x256xbf16>
    %c4 = arith.constant 4 : index
    %c0_7 = arith.constant 0 : index
    %8 = vector.load %arg8[%c4, %c0_7] : memref<36x256xbf16, #tpu.memory_space<vmem>>, vector<4x256xbf16>
    tpu.vector_store %arg8[%c4, %c0_7], %7 {strides = array<i32>} : memref<36x256xbf16, #tpu.memory_space<vmem>>, vector<4x256xbf16>,
    %c0_8 = arith.constant 0 : index
    %c0_9 = arith.constant 0 : index
    %c2 = arith.constant 2 : index
    %9 = vector.load %arg2[%c0_8, %c0_9, %c2] : memref<1x4x294xbf16, #tpu.memory_space<vmem>>, vector<1x4x256xbf16>
    %10 = vector.shape_cast %9 : vector<1x4x256xbf16> to vector<4x256xbf16>
    %c8 = arith.constant 8 : index
    %c0_10 = arith.constant 0 : index
    %11 = vector.load %arg8[%c8, %c0_10] : memref<36x256xbf16, #tpu.memory_space<vmem>>, vector<4x256xbf16>
    tpu.vector_store %arg8[%c8, %c0_10], %10 {strides = array<i32>} : memref<36x256xbf16, #tpu.memory_space<vmem>>, vector<4x256xbf16>,
    %c0_11 = arith.constant 0 : index
    %c0_12 = arith.constant 0 : index
    %c18 = arith.constant 18 : index
    %12 = vector.load %arg2[%c0_11, %c0_12, %c18] : memref<1x4x294xbf16, #tpu.memory_space<vmem>>, vector<1x4x256xbf16>
    %13 = vector.shape_cast %12 : vector<1x4x256xbf16> to vector<4x256xbf16>
    %c12 = arith.constant 12 : index
    %c0_13 = arith.constant 0 : index
    %14 = vector.load %arg8[%c12, %c0_13] : memref<36x256xbf16, #tpu.memory_space<vmem>>, vector<4x256xbf16>
    tpu.vector_store %arg8[%c12, %c0_13], %13 {strides = array<i32>} : memref<36x256xbf16, #tpu.memory_space<vmem>>, vector<4x256xbf16>,
    %c0_14 = arith.constant 0 : index
    %c0_15 = arith.constant 0 : index
    %c19 = arith.constant 19 : index
    %15 = vector.load %arg2[%c0_14, %c0_15, %c19] : memref<1x4x294xbf16, #tpu.memory_space<vmem>>, vector<1x4x256xbf16>
    %16 = vector.shape_cast %15 : vector<1x4x256xbf16> to vector<4x256xbf16>
    %c16 = arith.constant 16 : index
    %c0_16 = arith.constant 0 : index
    %17 = vector.load %arg8[%c16, %c0_16] : memref<36x256xbf16, #tpu.memory_space<vmem>>, vector<4x256xbf16>
    tpu.vector_store %arg8[%c16, %c0_16], %16 {strides = array<i32>} : memref<36x256xbf16, #tpu.memory_space<vmem>>, vector<4x256xbf16>,
    %c0_17 = arith.constant 0 : index
    %c0_18 = arith.constant 0 : index
    %c20 = arith.constant 20 : index
    %18 = vector.load %arg2[%c0_17, %c0_18, %c20] : memref<1x4x294xbf16, #tpu.memory_space<vmem>>, vector<1x4x256xbf16>
    %19 = vector.shape_cast %18 : vector<1x4x256xbf16> to vector<4x256xbf16>
    %c20_19 = arith.constant 20 : index
    %c0_20 = arith.constant 0 : index
    %20 = vector.load %arg8[%c20_19, %c0_20] : memref<36x256xbf16, #tpu.memory_space<vmem>>, vector<4x256xbf16>
    tpu.vector_store %arg8[%c20_19, %c0_20], %19 {strides = array<i32>} : memref<36x256xbf16, #tpu.memory_space<vmem>>, vector<4x256xbf16>,
    %c0_21 = arith.constant 0 : index
    %c0_22 = arith.constant 0 : index
    %c36 = arith.constant 36 : index
    %21 = vector.load %arg2[%c0_21, %c0_22, %c36] : memref<1x4x294xbf16, #tpu.memory_space<vmem>>, vector<1x4x256xbf16>
    %22 = vector.shape_cast %21 : vector<1x4x256xbf16> to vector<4x256xbf16>
    %c24 = arith.constant 24 : index
    %c0_23 = arith.constant 0 : index
    %23 = vector.load %arg8[%c24, %c0_23] : memref<36x256xbf16, #tpu.memory_space<vmem>>, vector<4x256xbf16>
    tpu.vector_store %arg8[%c24, %c0_23], %22 {strides = array<i32>} : memref<36x256xbf16, #tpu.memory_space<vmem>>, vector<4x256xbf16>,
    %c0_24 = arith.constant 0 : index
    %c0_25 = arith.constant 0 : index
    %c37 = arith.constant 37 : index
    %24 = vector.load %arg2[%c0_24, %c0_25, %c37] : memref<1x4x294xbf16, #tpu.memory_space<vmem>>, vector<1x4x256xbf16>
    %25 = vector.shape_cast %24 : vector<1x4x256xbf16> to vector<4x256xbf16>
    %c28 = arith.constant 28 : index
    %c0_26 = arith.constant 0 : index
    %26 = vector.load %arg8[%c28, %c0_26] : memref<36x256xbf16, #tpu.memory_space<vmem>>, vector<4x256xbf16>
    tpu.vector_store %arg8[%c28, %c0_26], %25 {strides = array<i32>} : memref<36x256xbf16, #tpu.memory_space<vmem>>, vector<4x256xbf16>,
    %c0_27 = arith.constant 0 : index
    %c0_28 = arith.constant 0 : index
    %c38 = arith.constant 38 : index
    %27 = vector.load %arg2[%c0_27, %c0_28, %c38] : memref<1x4x294xbf16, #tpu.memory_space<vmem>>, vector<1x4x256xbf16>
    %28 = vector.shape_cast %27 : vector<1x4x256xbf16> to vector<4x256xbf16>
    %c32 = arith.constant 32 : index
    %c0_29 = arith.constant 0 : index
    %29 = vector.load %arg8[%c32, %c0_29] : memref<36x256xbf16, #tpu.memory_space<vmem>>, vector<4x256xbf16>
    tpu.vector_store %arg8[%c32, %c0_29], %28 {strides = array<i32>} : memref<36x256xbf16, #tpu.memory_space<vmem>>, vector<4x256xbf16>,
    %c0_30 = arith.constant 0 : index
    %c0_31 = arith.constant 0 : index
    %30 = vector.load %arg4[%c0_30, %c0_31] : memref<8x36xbf16, #tpu.memory_space<vmem>>, vector<8x36xbf16>
    %c0_32 = arith.constant 0 : index
    %c0_33 = arith.constant 0 : index
    %31 = vector.load %arg8[%c0_32, %c0_33] : memref<36x256xbf16, #tpu.memory_space<vmem>>, vector<36x256xbf16>
    %cst = arith.constant dense<0.000000e+00> : vector<8x256xf32>
    %32 = tpu.matmul %30, %31, %cst {dimension_numbers = #tpu.dot_dimension_numbers<[1], [0], [0], [1], [0, 0, 1, 1], [], []>} : vector<8x36xbf16>, vector<36x256xbf16>, vector<8x256xf32> -> vector<8x256xf32>
    %c0_34 = arith.constant 0 : index
    %c0_35 = arith.constant 0 : index
    %c0_36 = arith.constant 0 : index
    %33 = vector.load %arg3[%c0_34, %c0_35, %c0_36] : memref<1x1x256xf32, #tpu.memory_space<vmem>>, vector<1x1x256xf32>
    %34 = vector.shape_cast %33 : vector<1x1x256xf32> to vector<1x256xf32>
    %35 = vector.broadcast %34 : vector<1x256xf32> to vector<8x256xf32>
    %36 = arith.mulf %32, %35 : vector<8x256xf32>
    %c0_37 = arith.constant 0 : index
    %c0_38 = arith.constant 0 : index
    %37 = vector.load %arg6[%c0_37, %c0_38] : memref<8x1xf32, #tpu.memory_space<vmem>>, vector<8x1xf32>
    %cst_39 = arith.constant dense<0.000000e+00> : vector<8xf32>
    %38 = vector.multi_reduction <add>, %36, %cst_39 [1] : vector<8x256xf32> to vector<8xf32>
    %39 = vector.shape_cast %38 : vector<8xf32> to vector<8x1xf32>
    %40 = arith.addf %37, %39 : vector<8x1xf32>
    %c0_40 = arith.constant 0 : index
    %c0_41 = arith.constant 0 : index
    %41 = vector.load %arg6[%c0_40, %c0_41] : memref<8x1xf32, #tpu.memory_space<vmem>>, vector<8x1xf32>
    tpu.vector_store %arg6[%c0_40, %c0_41], %40 {strides = array<i32>} : memref<8x1xf32, #tpu.memory_space<vmem>>, vector<8x1xf32>,
    %c0_42 = arith.constant 0 : index
    %c0_43 = arith.constant 0 : index
    %42 = vector.load %arg7[%c0_42, %c0_43] : memref<8x1xf32, #tpu.memory_space<vmem>>, vector<8x1xf32>
    %43 = arith.mulf %36, %32 : vector<8x256xf32>
    %cst_44 = arith.constant dense<0.000000e+00> : vector<8xf32>
    %44 = vector.multi_reduction <add>, %43, %cst_44 [1] : vector<8x256xf32> to vector<8xf32>
    %45 = vector.shape_cast %44 : vector<8xf32> to vector<8x1xf32>
    %46 = arith.addf %42, %45 : vector<8x1xf32>
    %c0_45 = arith.constant 0 : index
    %c0_46 = arith.constant 0 : index
    %47 = vector.load %arg7[%c0_45, %c0_46] : memref<8x1xf32, #tpu.memory_space<vmem>>, vector<8x1xf32>
    tpu.vector_store %arg7[%c0_45, %c0_46], %46 {strides = array<i32>} : memref<8x1xf32, #tpu.memory_space<vmem>>, vector<8x1xf32>,
    %c0_47 = arith.constant 0 : index
    %c0_48 = arith.constant 0 : index
    %48 = vector.load %arg5[%c0_47, %c0_48] : memref<8x256xf32, #tpu.memory_space<vmem>>, vector<8x256xf32>
    tpu.vector_store %arg5[%c0_47, %c0_48], %32 {strides = array<i32>} : memref<8x256xf32, #tpu.memory_space<vmem>>, vector<8x256xf32>,
    return
  }
  func.func @transform_0(%arg0: i32, %arg1: i32) -> (i32, i32, i32) {
    %c0_i32 = arith.constant 0 : i32
    %c0_i32_0 = arith.constant 0 : i32
    %c0_i32_1 = arith.constant 0 : i32
    return %arg1, %c0_i32, %c0_i32_0 : i32, i32, i32
  }
  func.func @transform_1(%arg0: i32, %arg1: i32) -> (i32, i32, i32) {
    %c0_i32 = arith.constant 0 : i32
    %c0_i32_0 = arith.constant 0 : i32
    %c0_i32_1 = arith.constant 0 : i32
    return %arg1, %c0_i32, %c0_i32_0 : i32, i32, i32
  }
  func.func @transform_2(%arg0: i32, %arg1: i32) -> (i32, i32) {
    %c0_i32 = arith.constant 0 : i32
    %c0_i32_0 = arith.constant 0 : i32
    return %arg0, %c0_i32 : i32, i32
  }
  func.func @transform_3(%arg0: i32, %arg1: i32) -> (i32, i32) {
    %c0_i32 = arith.constant 0 : i32
    return %arg0, %arg1 : i32, i32
  }
  func.func @transform_4(%arg0: i32, %arg1: i32) -> (i32, i32) {
    %c0_i32 = arith.constant 0 : i32
    %c0_i32_0 = arith.constant 0 : i32
    return %arg0, %c0_i32 : i32, i32
  }
  func.func @transform_5(%arg0: i32, %arg1: i32) -> (i32, i32) {
    %c0_i32 = arith.constant 0 : i32
    %c0_i32_0 = arith.constant 0 : i32
    return %arg0, %c0_i32 : i32, i32
  }
}

</mosaic_0001>

<llo_original>
// kernel: conv_block_forward.3
$region0: #{conv_block_forward.3}
  #allocation0 [shape = 'u32[]', space=smem, size = 0x4, offset = 0x4, fixed_abs, tag = 'smem constant byte address 0x4 - core index']
  #allocation1 [shape = 'u32[72,128]{1,0:T(1,128)}', space=vmem, size = 0x9000, scoped, tag = 'internal scratch']
  %s0 = inlined_call_operand.vmem [shape: f32[8,768], index: 0, kind: input, shape index: {}]
  %s1 = inlined_call_operand.vmem [shape: f32[8,1], index: 1, kind: input, shape index: {}]
  %s2 = inlined_call_operand.vmem [shape: f32[8,1], index: 2, kind: input, shape index: {}]
  %s3 = inlined_call_operand.vmem [shape: f32[8,768], index: 3, kind: output, shape index: {}]
  %s4 = sld [smem:[#allocation0]]
  $region45: #{conv_block_forward.3} parent=0
    _
  %s6 = ssub.s32 1, %s4
  %s7 = scalar_select 0, %s6, %s4
  loop: start=0, step=1, limit=5
  $region2: #{conv_block_forward.3} parent=0 // loop_pre_header
    _
  $region3: #{conv_block_forward.3} parent=0 // loop_header
    %s9 = sphi 0, %s13
    %p10 = scmp.ge.s32.totalorder %s9, 5
    %s16 = sphi 0, %s28
    %s17 = sphi 0, %s24
    %s18 = sphi 0, %s16
    %s19 = sphi 0, %s17
    %s20 = sphi 0, %s18
    %s21 = sphi 0, %s19
    %s33 = sphi 0, %s35
    %s36 = sphi 0, %s33
    %s37 = sphi 0, %s36
    %s53 = sphi 0, %s37
    %s59 = sphi 0, %s61
    %s62 = sphi 0, %s59
    %s63 = sphi 0, %s62
    %s79 = sphi 0, %s63
    %s85 = sphi 0, %s87
    %s88 = sphi 0, %s85
    %s89 = sphi 0, %s88
    %s105 = sphi 0, %s89
    %s113 = sphi 0, %s115
    %s116 = sphi 0, %s113
    %s117 = sphi 0, %s116
    %s133 = sphi 0, %s117
  $region4: #{conv_block_forward.3} parent=0 // loop_header_branch
    %12 = sbr.rel (%p10) target = $region8
  $region5: #{conv_block_forward.3} parent=0 // loop_body
    %s14 = ssub.s32 %s9, 1
    %s15 = ssub.s32 %s9, 2
    %s22 = sadd.s32 1, %s17
    %p23 = scmp.ge.s32.totalorder %s22, 3
    %s24 = scalar_select %p23, 0, %s22
    %s25 = sadd.s32 1, %s16
    %s26 = scalar_select %p23, %s25, %s16
    %p27 = scmp.ge.s32.totalorder %s26, 1
    %s28 = scalar_select %p27, 0, %s26
    %s29 = ssub.s32 %s16, %s28
    %s30 = ssub.s32 %s17, %s24
    %s31 = sor.u32 %s29, %s30
    %p32 = scmp.eq.s32.totalorder %s31, 0
    %s34 = sadd.s32 %s33, 1
    %s35 = scalar_select %p32, %s33, %s34
    %p38 = pneg %p32
    %p39 = scmp.eq.s32.totalorder %s9, 2
    %p40 = por %p38, %p39
    %p41 = scmp.ne.s32.totalorder %s33, %s36
    %p42 = scmp.eq.s32.totalorder %s9, 0
    %p43 = por %p41, %p42
    %p44 = scmp.ne.s32.totalorder %s33, %s36
    %p45 = scmp.eq.s32.totalorder %s14, 2
    %p46 = por %p44, %p45
    %p47 = scmp.ne.s32.totalorder %s36, %s37
    %p48 = scmp.eq.s32.totalorder %s14, 0
    %p49 = por %p47, %p48
    %p50 = scmp.ne.s32.totalorder %s36, %s37
    %p51 = scmp.eq.s32.totalorder %s15, 2
    %p52 = por %p50, %p51
    %p54 = scmp.ne.s32.totalorder %s37, %s53
    %p55 = scmp.eq.s32.totalorder %s15, 0
    %p56 = por %p54, %p55
    %s57 = ssub.s32 %s16, %s28
    %p58 = scmp.eq.s32.totalorder %s57, 0
    %s60 = sadd.s32 %s59, 1
    %s61 = scalar_select %p58, %s59, %s60
    %p64 = pneg %p58
    %p65 = scmp.eq.s32.totalorder %s9, 2
    %p66 = por %p64, %p65
    %p67 = scmp.ne.s32.totalorder %s59, %s62
    %p68 = scmp.eq.s32.totalorder %s9, 0
    %p69 = por %p67, %p68
    %p70 = scmp.ne.s32.totalorder %s59, %s62
    %p71 = scmp.eq.s32.totalorder %s14, 2
    %p72 = por %p70, %p71
    %p73 = scmp.ne.s32.totalorder %s62, %s63
    %p74 = scmp.eq.s32.totalorder %s14, 0
    %p75 = por %p73, %p74
    %p76 = scmp.ne.s32.totalorder %s62, %s63
    %p77 = scmp.eq.s32.totalorder %s15, 2
    %p78 = por %p76, %p77
    %p80 = scmp.ne.s32.totalorder %s63, %s79
    %p81 = scmp.eq.s32.totalorder %s15, 0
    %p82 = por %p80, %p81
    %s83 = ssub.s32 %s16, %s28
    %p84 = scmp.eq.s32.totalorder %s83, 0
    %s86 = sadd.s32 %s85, 1
    %s87 = scalar_select %p84, %s85, %s86
    %p90 = pneg %p84
    %p91 = scmp.eq.s32.totalorder %s9, 2
    %p92 = por %p90, %p91
    %p93 = scmp.ne.s32.totalorder %s85, %s88
    %p94 = scmp.eq.s32.totalorder %s9, 0
    %p95 = por %p93, %p94
    %p96 = scmp.ne.s32.totalorder %s85, %s88
    %p97 = scmp.eq.s32.totalorder %s14, 2
    %p98 = por %p96, %p97
    %p99 = scmp.ne.s32.totalorder %s88, %s89
    %p100 = scmp.eq.s32.totalorder %s14, 0
    %p101 = por %p99, %p100
    %p102 = scmp.ne.s32.totalorder %s88, %s89
    %p103 = scmp.eq.s32.totalorder %s15, 2
    %p104 = por %p102, %p103
    %p106 = scmp.ne.s32.totalorder %s89, %s105
    %p107 = scmp.eq.s32.totalorder %s15, 0
    %p108 = por %p106, %p107
    %s109 = ssub.s32 %s16, %s28
    %s110 = ssub.s32 %s17, %s24
    %s111 = sor.u32 %s109, %s110
    %p112 = scmp.eq.s32.totalorder %s111, 0
    %s114 = sadd.s32 %s113, 1
    %s115 = scalar_select %p112, %s113, %s114
    %p118 = pneg %p112
    %p119 = scmp.eq.s32.totalorder %s9, 2
    %p120 = por %p118, %p119
    %p121 = scmp.ne.s32.totalorder %s113, %s116
    %p122 = scmp.eq.s32.totalorder %s9, 0
    %p123 = por %p121, %p122
    %p124 = scmp.ne.s32.totalorder %s113, %s116
    %p125 = scmp.eq.s32.totalorder %s14, 2
    %p126 = por %p124, %p125
    %p127 = scmp.ne.s32.totalorder %s116, %s117
    %p128 = scmp.eq.s32.totalorder %s14, 0
    %p129 = por %p127, %p128
    %p130 = scmp.ne.s32.totalorder %s116, %s117
    %p131 = scmp.eq.s32.totalorder %s15, 2
    %p132 = por %p130, %p131
    %p134 = scmp.ne.s32.totalorder %s117, %s133
    %p135 = scmp.eq.s32.totalorder %s15, 0
    %p136 = por %p134, %p135
    %p137 = scmp.le.s32.totalorder 1, %s9
    %p138 = scmp.lt.s32.totalorder %s9, 4
    %p139 = pnand %p137, %p138
    %p140 = pneg %p139
    // Predicated region
    $region9: #{conv_block_forward.3} parent=5 // pred_check
      _
    $region10: #{conv_block_forward.3} parent=5 // pred_check_branch
      %142 = sbr.rel (%p139) target = $region12
    $region11: #{conv_block_forward.3} parent=5 // pred_region
      %s143 = ssub.s32 %s9, 1
      // Predicated region
      $region13: #{conv_block_forward.3} parent=11 // pred_check
        %p144 = pneg %p75
      $region14: #{conv_block_forward.3} parent=11 // pred_check_branch
        %146 = sbr.rel (%p144) target = $region16
      $region15: #{conv_block_forward.3} parent=11 // pred_region
        %p147 = scmp.lt.s32.totalorder %s18, 0
        %s148 = scalar_select %p147, %s18, 0
        %s149 = smul.addr %s148, 8
        %s150 = scalar_lea.vmem %s1, %s149
      $region16: #{conv_block_forward.3} parent=11 // pred_fallthru
        _
      // Predicated region
      $region17: #{conv_block_forward.3} parent=11 // pred_check
        %p151 = pneg %p101
      $region18: #{conv_block_forward.3} parent=11 // pred_check_branch
        %153 = sbr.rel (%p151) target = $region20
      $region19: #{conv_block_forward.3} parent=11 // pred_region
        %p154 = scmp.lt.s32.totalorder %s18, 0
        %s155 = scalar_select %p154, %s18, 0
        %s156 = smul.addr %s155, 8
        %s157 = scalar_lea.vmem %s2, %s156
      $region20: #{conv_block_forward.3} parent=11 // pred_fallthru
        _
    $region12: #{conv_block_forward.3} parent=5 // pred_fallthru
      _
    %p158 = scmp.lt.s32.totalorder %s9, 3
    // Predicated region
    $region21: #{conv_block_forward.3} parent=5 // pred_check
      %p159 = pneg %p158
    $region22: #{conv_block_forward.3} parent=5 // pred_check_branch
      %161 = sbr.rel (%p159) target = $region24
    $region23: #{conv_block_forward.3} parent=5 // pred_region
      // Predicated region
      $region25: #{conv_block_forward.3} parent=23 // pred_check
        %p162 = pneg %p43
      $region26: #{conv_block_forward.3} parent=23 // pred_check_branch
        %164 = sbr.rel (%p162) target = $region28
      $region27: #{conv_block_forward.3} parent=23 // pred_region
        %s165 = smul.u32 2, %s17
        %p166 = scmp.lt.s32.totalorder %s16, 0
        %s167 = scalar_select %p166, %s16, 0
        %p168 = scmp.lt.s32.totalorder %s165, 5
        %s169 = scalar_select %p168, %s165, 5
        %s170 = smul.addr %s167, 6
        %s171 = sadd.s32 %s169, %s170
        %s172 = smul.addr %s171, 8
        %s173 = scalar_lea.vmem %s0, %s172
        %s174 = smul.u32 2, %s17
      $region28: #{conv_block_forward.3} parent=23 // pred_fallthru
        _
    $region24: #{conv_block_forward.3} parent=5 // pred_fallthru
      _
    %p175 = scmp.le.s32.totalorder 1, %s9
    %p176 = scmp.lt.s32.totalorder %s9, 4
    %p177 = pnand %p175, %p176
    %p178 = pneg %p177
    // Predicated region
    $region29: #{conv_block_forward.3} parent=5 // pred_check
      _
    $region30: #{conv_block_forward.3} parent=5 // pred_check_branch
      %180 = sbr.rel (%p177) target = $region32
    $region31: #{conv_block_forward.3} parent=5 // pred_region
      %s181 = ssub.s32 %s9, 1
      %s182 = smul.u32 2, %s19
      %p183 = scmp.lt.s32.totalorder %s18, 0
      %s184 = scalar_select %p183, %s18, 0
      %p185 = scmp.lt.s32.totalorder %s182, 5
      %s186 = scalar_select %p185, %s182, 5
      %s187 = smul.addr %s184, 6
      %s188 = sadd.s32 %s186, %s187
      %s189 = smul.addr %s188, 8
      %s190 = scalar_lea.vmem %s0, %s189
      %p191 = pneg %p49
      %p192 = pneg %p46
      %p193 = scmp.lt.s32.totalorder %s18, 0
      %s194 = scalar_select %p193, %s18, 0
      %s195 = smul.addr %s194, 8
      %s196 = scalar_lea.vmem %s1, %s195
      %p197 = pneg %p75
      %p198 = pneg %p72
      %p199 = scmp.lt.s32.totalorder %s18, 0
      %s200 = scalar_select %p199, %s18, 0
      %s201 = smul.addr %s200, 8
      %s202 = scalar_lea.vmem %s2, %s201
      %p203 = pneg %p101
      %p204 = pneg %p98
      %p205 = pneg %p129
      %p206 = pneg %p126
      %s207 = smul.u32 2, %s19
      %p208 = scmp.lt.s32.totalorder %s18, 0
      %s209 = scalar_select %p208, %s18, 0
      %p210 = scmp.lt.s32.totalorder %s207, 5
      %s211 = scalar_select %p210, %s207, 5
      %s212 = smul.addr %s209, 6
      %s213 = sadd.s32 %s211, %s212
      %s214 = smul.addr %s213, 8
      %s215 = scalar_lea.vmem %s3, %s214
      %s216 = smul.u32 2, %s19
      %p217 = scmp.lt.s32.totalorder %s18, 0
      %s218 = scalar_select %p217, %s18, 0
      %p219 = scmp.lt.s32.totalorder %s216, 5
      %s220 = scalar_select %p219, %s216, 5
      %s221 = smul.addr %s218, 6
      %s222 = sadd.s32 %s220, %s221
      %s223 = smul.addr %s222, 8
      %s224 = scalar_lea.vmem %s0, %s223
      %s225 = smul.u32 2, %s19
      %p226 = scmp.lt.s32.totalorder %s18, 0
      %s227 = scalar_select %p226, %s18, 0
      %s228 = smul.addr %s227, 8
      %s229 = scalar_lea.vmem %s1, %s228
      %p230 = scmp.lt.s32.totalorder %s18, 0
      %s231 = scalar_select %p230, %s18, 0
      %s232 = smul.addr %s231, 8
      %s233 = scalar_lea.vmem %s2, %s232
      %s234 = smul.u32 2, %s19
      %p235 = scmp.lt.s32.totalorder %s18, 0
      %s236 = scalar_select %p235, %s18, 0
      %p237 = scmp.lt.s32.totalorder %s234, 5
      %s238 = scalar_select %p237, %s234, 5
      %s239 = smul.addr %s236, 6
      %s240 = sadd.s32 %s238, %s239
      %s241 = smul.addr %s240, 8
      %s242 = scalar_lea.vmem %s3, %s241
      %s243 = smul.u32 2, %s19
      %v244 = vld [vmem:[%s224] sm:$0xff]
      %v245 = vld [vmem:[%s224 + $0x8] sm:$0xff]
      %v246 = vld [vmem:[%s229] sm:$0xff]
      %248 = vset.pattern.permute.xlu0 0
      %249 = vperm.xlu0 %248, %v246
      %v250 = vpop.permute.xlu0 %249
      %v252 = vmul.f32 %v244, %v250
      %v253 = vmul.f32 %v245, %v250
      %v254 = vld [vmem:[%s233] sm:$0xff]
      %256 = vset.pattern.permute.xlu0 0
      %257 = vperm.xlu0 %256, %v254
      %v258 = vpop.permute.xlu0 %257
      %v260 = vadd.f32 %v252, %v258
      %v261 = vadd.f32 %v253, %v258
      %v262 = vmax.f32 %v260, 0.0
      %v263 = vmax.f32 %v261, 0.0
      %264 = vst [vmem:[%s242] sm:$0xff] %v262
      %265 = vst [vmem:[%s242 + $0x8] sm:$0xff] %v263
      %s266 = smul.u32 2, %s19
      %p267 = scmp.lt.s32.totalorder %s18, 0
      %s268 = scalar_select %p267, %s18, 0
      %p269 = scmp.lt.s32.totalorder %s266, 5
      %s270 = scalar_select %p269, %s266, 5
      %s271 = smul.addr %s268, 6
      %s272 = sadd.s32 %s270, %s271
      %s273 = smul.addr %s272, 8
      %s274 = scalar_lea.vmem %s3, %s273
      // Predicated region
      $region33: #{conv_block_forward.3} parent=31 // pred_check
        %p275 = pneg %p126
      $region34: #{conv_block_forward.3} parent=31 // pred_check_branch
        %277 = sbr.rel (%p275) target = $region36
      $region35: #{conv_block_forward.3} parent=31 // pred_region
        %s278 = smul.u32 2, %s19
      $region36: #{conv_block_forward.3} parent=31 // pred_fallthru
        _
    $region32: #{conv_block_forward.3} parent=5 // pred_fallthru
      _
    %p279 = scmp.le.s32.totalorder 2, %s9
    // Predicated region
    $region37: #{conv_block_forward.3} parent=5 // pred_check
      %p280 = pneg %p279
    $region38: #{conv_block_forward.3} parent=5 // pred_check_branch
      %282 = sbr.rel (%p280) target = $region40
    $region39: #{conv_block_forward.3} parent=5 // pred_region
      %s283 = ssub.s32 %s9, 2
      // Predicated region
      $region41: #{conv_block_forward.3} parent=39 // pred_check
        %p284 = pneg %p132
      $region42: #{conv_block_forward.3} parent=39 // pred_check_branch
        %286 = sbr.rel (%p284) target = $region44
      $region43: #{conv_block_forward.3} parent=39 // pred_region
        %s287 = smul.u32 2, %s21
        %p288 = scmp.lt.s32.totalorder %s20, 0
        %s289 = scalar_select %p288, %s20, 0
        %p290 = scmp.lt.s32.totalorder %s287, 5
        %s291 = scalar_select %p290, %s287, 5
        %s292 = smul.addr %s289, 6
        %s293 = sadd.s32 %s291, %s292
        %s294 = smul.addr %s293, 8
        %s295 = scalar_lea.vmem %s3, %s294
      $region44: #{conv_block_forward.3} parent=39 // pred_fallthru
        _
    $region40: #{conv_block_forward.3} parent=5 // pred_fallthru
      _
  $region6: #{conv_block_forward.3} parent=0 // loop_footer
    %s13 = sadd.s32 1, %s9
  $region7: #{conv_block_forward.3} parent=0 // loop_footer_branch
    %8 = sbr.rel target = $region3
  $region8: #{conv_block_forward.3} parent=0 // loop_exit
    _

// kernel: conv_block_forward.2
$region0: #{conv_block_forward.2}
  #allocation0 [shape = 'u32[]', space=smem, size = 0x4, offset = 0x4, fixed_abs, tag = 'smem constant byte address 0x4 - core index']
  #allocation1 [shape = 'u32[72,128]{1,0:T(1,128)}', space=vmem, size = 0x9000, scoped, tag = 'internal scratch']
  #allocation2 [shape = 'bf16[36,256]{1,0:T(8,128)(2,1)}', space=vmem, size = 0x5000, scoped, tag = 'scratch operand']
  %s0 = inlined_call_operand.vmem [shape: bf16[3,4,294], index: 0, kind: input, shape index: {}]
  %s1 = inlined_call_operand.vmem [shape: f32[3,1,256], index: 1, kind: input, shape index: {}]
  %s2 = inlined_call_operand.vmem [shape: bf16[8,36], index: 2, kind: input, shape index: {}]
  %s3 = inlined_call_operand.vmem [shape: f32[8,768], index: 3, kind: output, shape index: {0}]
  %s4 = inlined_call_operand.vmem [shape: f32[8,1], index: 4, kind: output, shape index: {1}]
  %s5 = inlined_call_operand.vmem [shape: f32[8,1], index: 5, kind: output, shape index: {2}]
  %6 = xla_tuple %s3, %s4, %s5
  %s7 = sld [smem:[#allocation0]]
  $region65: #{conv_block_forward.2} parent=0
    _
  %s9 = ssub.s32 1, %s7
  %s10 = scalar_select 0, %s9, %s7
  loop: start=0, step=1, limit=5
  $region2: #{conv_block_forward.2} parent=0 // loop_pre_header
    _
  $region3: #{conv_block_forward.2} parent=0 // loop_header
    %s12 = sphi 0, %s16
    %p13 = scmp.ge.s32.totalorder %s12, 5
    %s19 = sphi 0, %s31
    %s20 = sphi 0, %s27
    %s21 = sphi 0, %s19
    %s22 = sphi 0, %s20
    %s23 = sphi 0, %s21
    %s24 = sphi 0, %s22
    %s34 = sphi 0, %s36
    %s37 = sphi 0, %s34
    %s38 = sphi 0, %s37
    %s54 = sphi 0, %s38
    %s60 = sphi 0, %s62
    %s63 = sphi 0, %s60
    %s64 = sphi 0, %s63
    %s80 = sphi 0, %s64
    %s86 = sphi 0, %s88
    %s89 = sphi 0, %s86
    %s90 = sphi 0, %s89
    %s106 = sphi 0, %s90
    %s114 = sphi 0, %s116
    %s117 = sphi 0, %s114
    %s118 = sphi 0, %s117
    %s134 = sphi 0, %s118
    %s140 = sphi 0, %s142
    %s143 = sphi 0, %s140
    %s144 = sphi 0, %s143
    %s160 = sphi 0, %s144
    %s166 = sphi 0, %s168
    %s169 = sphi 0, %s166
    %s170 = sphi 0, %s169
    %s186 = sphi 0, %s170
  $region4: #{conv_block_forward.2} parent=0 // loop_header_branch
    %15 = sbr.rel (%p13) target = $region8
  $region5: #{conv_block_forward.2} parent=0 // loop_body
    %s17 = ssub.s32 %s12, 1
    %s18 = ssub.s32 %s12, 2
    %s25 = sadd.s32 1, %s20
    %p26 = scmp.ge.s32.totalorder %s25, 3
    %s27 = scalar_select %p26, 0, %s25
    %s28 = sadd.s32 1, %s19
    %s29 = scalar_select %p26, %s28, %s19
    %p30 = scmp.ge.s32.totalorder %s29, 1
    %s31 = scalar_select %p30, 0, %s29
    %s32 = ssub.s32 %s20, %s27
    %p33 = scmp.eq.s32.totalorder %s32, 0
    %s35 = sadd.s32 %s34, 1
    %s36 = scalar_select %p33, %s34, %s35
    %p39 = pneg %p33
    %p40 = scmp.eq.s32.totalorder %s12, 2
    %p41 = por %p39, %p40
    %p42 = scmp.ne.s32.totalorder %s34, %s37
    %p43 = scmp.eq.s32.totalorder %s12, 0
    %p44 = por %p42, %p43
    %p45 = scmp.ne.s32.totalorder %s34, %s37
    %p46 = scmp.eq.s32.totalorder %s17, 2
    %p47 = por %p45, %p46
    %p48 = scmp.ne.s32.totalorder %s37, %s38
    %p49 = scmp.eq.s32.totalorder %s17, 0
    %p50 = por %p48, %p49
    %p51 = scmp.ne.s32.totalorder %s37, %s38
    %p52 = scmp.eq.s32.totalorder %s18, 2
    %p53 = por %p51, %p52
    %p55 = scmp.ne.s32.totalorder %s38, %s54
    %p56 = scmp.eq.s32.totalorder %s18, 0
    %p57 = por %p55, %p56
    %s58 = ssub.s32 %s20, %s27
    %p59 = scmp.eq.s32.totalorder %s58, 0
    %s61 = sadd.s32 %s60, 1
    %s62 = scalar_select %p59, %s60, %s61
    %p65 = pneg %p59
    %p66 = scmp.eq.s32.totalorder %s12, 2
    %p67 = por %p65, %p66
    %p68 = scmp.ne.s32.totalorder %s60, %s63
    %p69 = scmp.eq.s32.totalorder %s12, 0
    %p70 = por %p68, %p69
    %p71 = scmp.ne.s32.totalorder %s60, %s63
    %p72 = scmp.eq.s32.totalorder %s17, 2
    %p73 = por %p71, %p72
    %p74 = scmp.ne.s32.totalorder %s63, %s64
    %p75 = scmp.eq.s32.totalorder %s17, 0
    %p76 = por %p74, %p75
    %p77 = scmp.ne.s32.totalorder %s63, %s64
    %p78 = scmp.eq.s32.totalorder %s18, 2
    %p79 = por %p77, %p78
    %p81 = scmp.ne.s32.totalorder %s64, %s80
    %p82 = scmp.eq.s32.totalorder %s18, 0
    %p83 = por %p81, %p82
    %s84 = ssub.s32 %s19, %s31
    %p85 = scmp.eq.s32.totalorder %s84, 0
    %s87 = sadd.s32 %s86, 1
    %s88 = scalar_select %p85, %s86, %s87
    %p91 = pneg %p85
    %p92 = scmp.eq.s32.totalorder %s12, 2
    %p93 = por %p91, %p92
    %p94 = scmp.ne.s32.totalorder %s86, %s89
    %p95 = scmp.eq.s32.totalorder %s12, 0
    %p96 = por %p94, %p95
    %p97 = scmp.ne.s32.totalorder %s86, %s89
    %p98 = scmp.eq.s32.totalorder %s17, 2
    %p99 = por %p97, %p98
    %p100 = scmp.ne.s32.totalorder %s89, %s90
    %p101 = scmp.eq.s32.totalorder %s17, 0
    %p102 = por %p100, %p101
    %p103 = scmp.ne.s32.totalorder %s89, %s90
    %p104 = scmp.eq.s32.totalorder %s18, 2
    %p105 = por %p103, %p104
    %p107 = scmp.ne.s32.totalorder %s90, %s106
    %p108 = scmp.eq.s32.totalorder %s18, 0
    %p109 = por %p107, %p108
    %s110 = ssub.s32 %s19, %s31
    %s111 = ssub.s32 %s20, %s27
    %s112 = sor.u32 %s110, %s111
    %p113 = scmp.eq.s32.totalorder %s112, 0
    %s115 = sadd.s32 %s114, 1
    %s116 = scalar_select %p113, %s114, %s115
    %p119 = pneg %p113
    %p120 = scmp.eq.s32.totalorder %s12, 2
    %p121 = por %p119, %p120
    %p122 = scmp.ne.s32.totalorder %s114, %s117
    %p123 = scmp.eq.s32.totalorder %s12, 0
    %p124 = por %p122, %p123
    %p125 = scmp.ne.s32.totalorder %s114, %s117
    %p126 = scmp.eq.s32.totalorder %s17, 2
    %p127 = por %p125, %p126
    %p128 = scmp.ne.s32.totalorder %s117, %s118
    %p129 = scmp.eq.s32.totalorder %s17, 0
    %p130 = por %p128, %p129
    %p131 = scmp.ne.s32.totalorder %s117, %s118
    %p132 = scmp.eq.s32.totalorder %s18, 2
    %p133 = por %p131, %p132
    %p135 = scmp.ne.s32.totalorder %s118, %s134
    %p136 = scmp.eq.s32.totalorder %s18, 0
    %p137 = por %p135, %p136
    %s138 = ssub.s32 %s19, %s31
    %p139 = scmp.eq.s32.totalorder %s138, 0
    %s141 = sadd.s32 %s140, 1
    %s142 = scalar_select %p139, %s140, %s141
    %p145 = pneg %p139
    %p146 = scmp.eq.s32.totalorder %s12, 2
    %p147 = por %p145, %p146
    %p148 = scmp.ne.s32.totalorder %s140, %s143
    %p149 = scmp.eq.s32.totalorder %s12, 0
    %p150 = por %p148, %p149
    %p151 = scmp.ne.s32.totalorder %s140, %s143
    %p152 = scmp.eq.s32.totalorder %s17, 2
    %p153 = por %p151, %p152
    %p154 = scmp.ne.s32.totalorder %s143, %s144
    %p155 = scmp.eq.s32.totalorder %s17, 0
    %p156 = por %p154, %p155
    %p157 = scmp.ne.s32.totalorder %s143, %s144
    %p158 = scmp.eq.s32.totalorder %s18, 2
    %p159 = por %p157, %p158
    %p161 = scmp.ne.s32.totalorder %s144, %s160
    %p162 = scmp.eq.s32.totalorder %s18, 0
    %p163 = por %p161, %p162
    %s164 = ssub.s32 %s19, %s31
    %p165 = scmp.eq.s32.totalorder %s164, 0
    %s167 = sadd.s32 %s166, 1
    %s168 = scalar_select %p165, %s166, %s167
    %p171 = pneg %p165
    %p172 = scmp.eq.s32.totalorder %s12, 2
    %p173 = por %p171, %p172
    %p174 = scmp.ne.s32.totalorder %s166, %s169
    %p175 = scmp.eq.s32.totalorder %s12, 0
    %p176 = por %p174, %p175
    %p177 = scmp.ne.s32.totalorder %s166, %s169
    %p178 = scmp.eq.s32.totalorder %s17, 2
    %p179 = por %p177, %p178
    %p180 = scmp.ne.s32.totalorder %s169, %s170
    %p181 = scmp.eq.s32.totalorder %s17, 0
    %p182 = por %p180, %p181
    %p183 = scmp.ne.s32.totalorder %s169, %s170
    %p184 = scmp.eq.s32.totalorder %s18, 2
    %p185 = por %p183, %p184
    %p187 = scmp.ne.s32.totalorder %s170, %s186
    %p188 = scmp.eq.s32.totalorder %s18, 0
    %p189 = por %p187, %p188
    %p190 = scmp.le.s32.totalorder 1, %s12
    %p191 = scmp.lt.s32.totalorder %s12, 4
    %p192 = pnand %p190, %p191
    %p193 = pneg %p192
    // Predicated region
    $region9: #{conv_block_forward.2} parent=5 // pred_check
      _
    $region10: #{conv_block_forward.2} parent=5 // pred_check_branch
      %195 = sbr.rel (%p192) target = $region12
    $region11: #{conv_block_forward.2} parent=5 // pred_region
      %s196 = ssub.s32 %s12, 1
      // Predicated region
      $region13: #{conv_block_forward.2} parent=11 // pred_check
        %p197 = pneg %p102
      $region14: #{conv_block_forward.2} parent=11 // pred_check_branch
        %199 = sbr.rel (%p197) target = $region16
      $region15: #{conv_block_forward.2} parent=11 // pred_region
        %p200 = scmp.lt.s32.totalorder %s21, 0
        %s201 = scalar_select %p200, %s21, 0
        %s202 = smul.addr %s201, 4
        %s203 = scalar_lea.vmem %s2, %s202
      $region16: #{conv_block_forward.2} parent=11 // pred_fallthru
        _
    $region12: #{conv_block_forward.2} parent=5 // pred_fallthru
      _
    %p204 = scmp.lt.s32.totalorder %s12, 3
    // Predicated region
    $region17: #{conv_block_forward.2} parent=5 // pred_check
      %p205 = pneg %p204
    $region18: #{conv_block_forward.2} parent=5 // pred_check_branch
      %207 = sbr.rel (%p205) target = $region20
    $region19: #{conv_block_forward.2} parent=5 // pred_region
      // Predicated region
      $region21: #{conv_block_forward.2} parent=19 // pred_check
        %p208 = pneg %p44
      $region22: #{conv_block_forward.2} parent=19 // pred_check_branch
        %210 = sbr.rel (%p208) target = $region24
      $region23: #{conv_block_forward.2} parent=19 // pred_region
        %p211 = scmp.lt.s32.totalorder %s20, 2
        %s212 = scalar_select %p211, %s20, 2
        %s213 = smul.addr %s212, 3
        %s214 = smul.addr %s213, 2
        %s215 = scalar_lea.vmem %s0, %s214
      $region24: #{conv_block_forward.2} parent=19 // pred_fallthru
        _
      // Predicated region
      $region25: #{conv_block_forward.2} parent=19 // pred_check
        %p216 = pneg %p70
      $region26: #{conv_block_forward.2} parent=19 // pred_check_branch
        %218 = sbr.rel (%p216) target = $region28
      $region27: #{conv_block_forward.2} parent=19 // pred_region
        %p219 = scmp.lt.s32.totalorder %s20, 2
        %s220 = scalar_select %p219, %s20, 2
        %s221 = smul.addr %s220, 2
        %s222 = scalar_lea.vmem %s1, %s221
      $region28: #{conv_block_forward.2} parent=19 // pred_fallthru
        _
    $region20: #{conv_block_forward.2} parent=5 // pred_fallthru
      _
    %p223 = scmp.le.s32.totalorder 1, %s12
    %p224 = scmp.lt.s32.totalorder %s12, 4
    %p225 = pnand %p223, %p224
    %p226 = pneg %p225
    // Predicated region
    $region29: #{conv_block_forward.2} parent=5 // pred_check
      _
    $region30: #{conv_block_forward.2} parent=5 // pred_check_branch
      %228 = sbr.rel (%p225) target = $region32
    $region31: #{conv_block_forward.2} parent=5 // pred_region
      %s229 = ssub.s32 %s12, 1
      %p230 = scmp.lt.s32.totalorder %s22, 2
      %s231 = scalar_select %p230, %s22, 2
      %s232 = smul.addr %s231, 3
      %s233 = smul.addr %s232, 2
      %s234 = scalar_lea.vmem %s0, %s233
      %p235 = pneg %p50
      %p236 = pneg %p47
      %p237 = scmp.lt.s32.totalorder %s22, 2
      %s238 = scalar_select %p237, %s22, 2
      %s239 = smul.addr %s238, 2
      %s240 = scalar_lea.vmem %s1, %s239
      %p241 = pneg %p76
      %p242 = pneg %p73
      %p243 = scmp.lt.s32.totalorder %s21, 0
      %s244 = scalar_select %p243, %s21, 0
      %s245 = smul.addr %s244, 4
      %s246 = scalar_lea.vmem %s2, %s245
      %p247 = pneg %p102
      %p248 = pneg %p99
      %p249 = pneg %p130
      %p250 = pneg %p127
      %s251 = smul.u32 2, %s22
      %p252 = scmp.lt.s32.totalorder %s21, 0
      %s253 = scalar_select %p252, %s21, 0
      %p254 = scmp.lt.s32.totalorder %s251, 5
      %s255 = scalar_select %p254, %s251, 5
      %s256 = smul.addr %s253, 6
      %s257 = sadd.s32 %s255, %s256
      %s258 = smul.addr %s257, 8
      %s259 = scalar_lea.vmem %s3, %s258
      %p260 = pneg %p156
      %p261 = pneg %p153
      %p262 = scmp.lt.s32.totalorder %s21, 0
      %s263 = scalar_select %p262, %s21, 0
      %s264 = smul.addr %s263, 8
      %s265 = scalar_lea.vmem %s4, %s264
      %p266 = pneg %p182
      %p267 = pneg %p179
      %p268 = scmp.lt.s32.totalorder %s21, 0
      %s269 = scalar_select %p268, %s21, 0
      %s270 = smul.addr %s269, 8
      %s271 = scalar_lea.vmem %s5, %s270
      %p272 = scmp.lt.s32.totalorder %s22, 2
      %s273 = scalar_select %p272, %s22, 2
      %s274 = smul.addr %s273, 3
      %s275 = smul.addr %s274, 2
      %s276 = scalar_lea.vmem %s0, %s275
      %p277 = scmp.lt.s32.totalorder %s22, 2
      %s278 = scalar_select %p277, %s22, 2
      %s279 = smul.addr %s278, 2
      %s280 = scalar_lea.vmem %s1, %s279
      %p281 = scmp.lt.s32.totalorder %s21, 0
      %s282 = scalar_select %p281, %s21, 0
      %s283 = smul.addr %s282, 4
      %s284 = scalar_lea.vmem %s2, %s283
      %s285 = smul.u32 2, %s22
      %p286 = scmp.lt.s32.totalorder %s21, 0
      %s287 = scalar_select %p286, %s21, 0
      %p288 = scmp.lt.s32.totalorder %s285, 5
      %s289 = scalar_select %p288, %s285, 5
      %s290 = smul.addr %s287, 6
      %s291 = sadd.s32 %s289, %s290
      %s292 = smul.addr %s291, 8
      %s293 = scalar_lea.vmem %s3, %s292
      %s294 = smul.u32 2, %s22
      %p295 = scmp.lt.s32.totalorder %s21, 0
      %s296 = scalar_select %p295, %s21, 0
      %s297 = smul.addr %s296, 8
      %s298 = scalar_lea.vmem %s4, %s297
      %p299 = scmp.lt.s32.totalorder %s21, 0
      %s300 = scalar_select %p299, %s21, 0
      %s301 = smul.addr %s300, 8
      %s302 = scalar_lea.vmem %s5, %s301
      %p304 = scmp.eq.s32.totalorder %s22, 0
      // Predicated region
      $region33: #{conv_block_forward.2} parent=31 // pred_check
        %p305 = pneg %p304
      $region34: #{conv_block_forward.2} parent=31 // pred_check_branch
        %307 = sbr.rel (%p305) target = $region36
      $region35: #{conv_block_forward.2} parent=31 // pred_region
        %vm308 = vcmask 7168
        %309 = vst.msk [vmem:[%s298] sm:$0xff] %vm308, 0.0
        %310 = vst.msk [vmem:[%s302] sm:$0xff] %vm308, 0.0
      $region36: #{conv_block_forward.2} parent=31 // pred_fallthru
        _
      %v311 = vld [vmem:[%s276] sm:$0xf]
      %313 = vst [vmem:[#allocation1] ss:$2 sm:$0xff] %v311
      %v314 = vld.sshfl [vmem:[#allocation1] sm:$0xff pattern:$0x75643120]
      %316 = vst [vmem:[#allocation2] sm:$0x33] %v314
      %v317 = vld [vmem:[%s276] sm:$0x3f]
      %s319 = scalar_lea.vmem [#allocation1], 1
      %320 = vst [vmem:[%s319] ss:$2 sm:$0xff] %v317
      %v321 = vld.sshfl [vmem:[#allocation1] sm:$0xff pattern:$0x75643120]
      %v323 = vld.sshfl [vmem:[#allocation1 + $0x8] sm:$0xff pattern:$0x75643120]
      %325 = vrot.lane.b32.xlu0 %v321, 127
      %v326 = vpop.permute.xlu0 %325
      %327 = vrot.lane.b32.xlu0 %v323, 127
      %v328 = vpop.permute.xlu0 %327
      %v329 = vrot.slane %v326, 4
      %v330 = vrot.slane %v328, 4
      %vm331 = vcmask 1043456
      %v332 = vsel %vm331, %v329, %v330
      %vm333 = vcmask 1039360
      %v334 = vsel %vm333, %v326, %v332
      %336 = vst [vmem:[#allocation2] sm:$0xcc] %v334
      %v337 = vld [vmem:[%s276] sm:$0x3f]
      %339 = vst [vmem:[#allocation1] ss:$2 sm:$0xff] %v337
      %v340 = vld.sshfl [vmem:[#allocation1] sm:$0xff pattern:$0x75643120]
      %v342 = vld.sshfl [vmem:[#allocation1 + $0x8] sm:$0xff pattern:$0x75643120]
      %344 = vrot.lane.b32.xlu0 %v340, 126
      %v345 = vpop.permute.xlu0 %344
      %346 = vrot.lane.b32.xlu0 %v342, 126
      %v347 = vpop.permute.xlu0 %346
      %v348 = vrot.slane %v345, 4
      %v349 = vrot.slane %v347, 4
      %v350 = vsel %vm331, %v348, %v349
      %vm351 = vcmask 1031168
      %v352 = vsel %vm351, %v345, %v350
      %354 = vst [vmem:[#allocation2 + $0x8] sm:$0x33] %v352
      %v355 = vld [vmem:[%s276] sm:$0x3f]
      %s357 = scalar_lea.vmem [#allocation1], 1
      %358 = vst [vmem:[%s357] ss:$2 sm:$0xff] %v355
      %v359 = vld.sshfl [vmem:[#allocation1] sm:$0xff pattern:$0x75643120]
      %v361 = vld.sshfl [vmem:[#allocation1 + $0x8] sm:$0xff pattern:$0x75643120]
      %363 = vrot.lane.b32.xlu0 %v359, 110
      %v364 = vpop.permute.xlu0 %363
      %365 = vrot.lane.b32.xlu0 %v361, 110
      %v366 = vpop.permute.xlu0 %365
      %v367 = vrot.slane %v364, 4
      %v368 = vrot.slane %v366, 4
      %v369 = vsel %vm331, %v367, %v368
      %vm370 = vcmask 900096
      %v371 = vsel %vm370, %v364, %v369
      %373 = vst [vmem:[#allocation2 + $0x8] sm:$0xcc] %v371
      %v374 = vld [vmem:[%s276] sm:$0x3f]
      %376 = vst [vmem:[#allocation1] ss:$2 sm:$0xff] %v374
      %v377 = vld.sshfl [vmem:[#allocation1] sm:$0xff pattern:$0x75643120]
      %v379 = vld.sshfl [vmem:[#allocation1 + $0x8] sm:$0xff pattern:$0x75643120]
      %381 = vrot.lane.b32.xlu0 %v377, 109
      %v382 = vpop.permute.xlu0 %381
      %383 = vrot.lane.b32.xlu0 %v379, 109
      %v384 = vpop.permute.xlu0 %383
      %v385 = vrot.slane %v382, 4
      %v386 = vrot.slane %v384, 4
      %v387 = vsel %vm331, %v385, %v386
      %vm388 = vcmask 891904
      %v389 = vsel %vm388, %v382, %v387
      %391 = vst [vmem:[#allocation2 + $0x10] sm:$0x33] %v389
      %v392 = vld [vmem:[%s276] sm:$0x3f]
      %s394 = scalar_lea.vmem [#allocation1], 1
      %395 = vst [vmem:[%s394] ss:$2 sm:$0xff] %v392
      %v396 = vld.sshfl [vmem:[#allocation1] sm:$0xff pattern:$0x75643120]
      %v398 = vld.sshfl [vmem:[#allocation1 + $0x8] sm:$0xff pattern:$0x75643120]
      %400 = vrot.lane.b32.xlu0 %v396, 108
      %v401 = vpop.permute.xlu0 %400
      %402 = vrot.lane.b32.xlu0 %v398, 108
      %v403 = vpop.permute.xlu0 %402
      %v404 = vrot.slane %v401, 4
      %v405 = vrot.slane %v403, 4
      %v406 = vsel %vm331, %v404, %v405
      %vm407 = vcmask 883712
      %v408 = vsel %vm407, %v401, %v406
      %410 = vst [vmem:[#allocation2 + $0x10] sm:$0xcc] %v408
      %v411 = vld [vmem:[%s276] sm:$0x3f]
      %413 = vst [vmem:[#allocation1] ss:$2 sm:$0xff] %v411
      %v414 = vld.sshfl [vmem:[#allocation1] sm:$0xff pattern:$0x75643120]
      %v416 = vld.sshfl [vmem:[#allocation1 + $0x8] sm:$0xff pattern:$0x75643120]
      %418 = vrot.lane.b32.xlu0 %v414, 92
      %v419 = vpop.permute.xlu0 %418
      %420 = vrot.lane.b32.xlu0 %v416, 92
      %v421 = vpop.permute.xlu0 %420
      %v422 = vrot.slane %v419, 4
      %v423 = vrot.slane %v421, 4
      %v424 = vsel %vm331, %v422, %v423
      %vm425 = vcmask 752640
      %v426 = vsel %vm425, %v419, %v424
      %428 = vst [vmem:[#allocation2 + $0x18] sm:$0x33] %v426
      %v429 = vld [vmem:[%s276] sm:$0x3f]
      %s431 = scalar_lea.vmem [#allocation1], 1
      %432 = vst [vmem:[%s431] ss:$2 sm:$0xff] %v429
      %v433 = vld.sshfl [vmem:[#allocation1] sm:$0xff pattern:$0x75643120]
      %v435 = vld.sshfl [vmem:[#allocation1 + $0x8] sm:$0xff pattern:$0x75643120]
      %437 = vrot.lane.b32.xlu0 %v433, 91
      %v438 = vpop.permute.xlu0 %437
      %439 = vrot.lane.b32.xlu0 %v435, 91
      %v440 = vpop.permute.xlu0 %439
      %v441 = vrot.slane %v438, 4
      %v442 = vrot.slane %v440, 4
      %v443 = vsel %vm331, %v441, %v442
      %vm444 = vcmask 744448
      %v445 = vsel %vm444, %v438, %v443
      %447 = vst [vmem:[#allocation2 + $0x18] sm:$0xcc] %v445
      %v448 = vld [vmem:[%s276] sm:$0x3f]
      %450 = vst [vmem:[#allocation1] ss:$2 sm:$0xff] %v448
      %v451 = vld.sshfl [vmem:[#allocation1] sm:$0xff pattern:$0x75643120]
      %v453 = vld.sshfl [vmem:[#allocation1 + $0x8] sm:$0xff pattern:$0x75643120]
      %455 = vrot.lane.b32.xlu0 %v451, 90
      %v456 = vpop.permute.xlu0 %455
      %457 = vrot.lane.b32.xlu0 %v453, 90
      %v458 = vpop.permute.xlu0 %457
      %v459 = vrot.slane %v456, 4
      %v460 = vrot.slane %v458, 4
      %v461 = vsel %vm331, %v459, %v460
      %vm462 = vcmask 736256
      %v463 = vsel %vm462, %v456, %v461
      %465 = vst [vmem:[#allocation2 + $0x20] sm:$0x33] %v463
      %v466 = vld [vmem:[%s284] sm:$0xf]
      %v467 = vld [vmem:[#allocation2] sm:$0xff]
      %v468 = vld [vmem:[#allocation2 + $0x8] sm:$0xff]
      %v469 = vld [vmem:[#allocation2 + $0x10] sm:$0xff]
      %v470 = vld [vmem:[#allocation2 + $0x18] sm:$0xff]
      %v471 = vld [vmem:[#allocation2 + $0x20] sm:$0x33]
      %v477 = vunpack.c.l.b16 %v467
      %v478 = vunpack.c.h.b16 %v467
      %v479 = vunpack.c.l.b16 %v468
      %v480 = vunpack.c.h.b16 %v468
      %v481 = vunpack.c.l.b16 %v469
      %v482 = vunpack.c.h.b16 %v469
      %v483 = vunpack.c.l.b16 %v470
      %v484 = vunpack.c.h.b16 %v470
      %v485 = vunpack.c.l.b16 %v471
      %v486 = vunpack.c.h.b16 %v471
      %v487 = vpack.c.b16 %v479, %v477
      %v488 = vpack.c.b16 %v480, %v478
      %v489 = vpack.c.b16 %v483, %v481
      %v490 = vpack.c.b16 %v484, %v482
      %v491 = vpack.c.b16 %v485, %v485
      %v492 = vpack.c.b16 %v486, %v486
      %vm497 = vcmask 293888
      %v499 = vsel %vm497, %v466, 0
      %vm501 = vcmask 1041408
      %v503 = vsel %vm501, %v491, 0
      %v506 = vsel %vm501, %v492, 0
      %508 = vmatpush.bf16.msra.mxu0 0
      %509 = vmatpush.bf16.msra.mxu0 0
      %510 = vmatpush.bf16.msra.mxu0 0
      %511 = vmatpush.bf16.msra.mxu0 0
      %512 = vmatpush.bf16.msra.mxu0 0
      %513 = vmatpush.bf16.msra.mxu0 %v503
      %514 = vmatpush.bf16.msra.mxu0 %v489
      %515 = vmatpush.bf16.msra.mxu0 %v487
      %516 = vmatmul.bf16.gmra.mxu0 %v499
      %v517 = vpop.f32.mrf.mxu0
      %v518 = vadd.f32 0.0, %v517
      %v519 = vpop.f32.mrf.mxu0
      %520 = vdwg.mxu0
      %521 = vmatpush.bf16.msra.mxu0 0
      %522 = vmatpush.bf16.msra.mxu0 0
      %523 = vmatpush.bf16.msra.mxu0 0
      %524 = vmatpush.bf16.msra.mxu0 0
      %525 = vmatpush.bf16.msra.mxu0 0
      %526 = vmatpush.bf16.msra.mxu0 %v506
      %527 = vmatpush.bf16.msra.mxu0 %v490
      %528 = vmatpush.bf16.msra.mxu0 %v488
      %529 = vmatmul.bf16.gmra.mxu0 %v499
      %v530 = vpop.f32.mrf.mxu0
      %v531 = vadd.f32 0.0, %v530
      %v532 = vpop.f32.mrf.mxu0
      %533 = vdwg.mxu0
      %v534 = vld [vmem:[%s280] sm:$0x3]
      %v536 = vperm.slane %v534, 0
      %v537 = vperm.slane %v534, 1
      %v540 = vmul.f32 %v518, %v536
      %v541 = vmul.f32 %v531, %v537
      %v542 = vld [vmem:[%s298] sm:$0xff]
      %v543 = vadd.f32 %v540, %v541
      %544 = vadd.xlane.f32.xlu0 %v543
      %v545 = vpop.xlane.xlu0 %544
      %v546 = vadd.f32 %v542, %v545
      %vm547 = vcmask 7168
      %548 = vst.msk [vmem:[%s298] sm:$0xff] %vm547, %v546
      %v549 = vld [vmem:[%s302] sm:$0xff]
      %v550 = vmul.f32 %v540, %v518
      %v551 = vmul.f32 %v541, %v531
      %v552 = vadd.f32 %v550, %v551
      %553 = vadd.xlane.f32.xlu0 %v552
      %v554 = vpop.xlane.xlu0 %553
      %v555 = vadd.f32 %v549, %v554
      %556 = vst.msk [vmem:[%s302] sm:$0xff] %vm547, %v555
      %557 = vst [vmem:[%s293] sm:$0xff] %v518
      %558 = vst [vmem:[%s293 + $0x8] sm:$0xff] %v531
      %s559 = smul.u32 2, %s22
      %p560 = scmp.lt.s32.totalorder %s21, 0
      %s561 = scalar_select %p560, %s21, 0
      %p562 = scmp.lt.s32.totalorder %s559, 5
      %s563 = scalar_select %p562, %s559, 5
      %s564 = smul.addr %s561, 6
      %s565 = sadd.s32 %s563, %s564
      %s566 = smul.addr %s565, 8
      %s567 = scalar_lea.vmem %s3, %s566
      %p568 = scmp.lt.s32.totalorder %s21, 0
      %s569 = scalar_select %p568, %s21, 0
      %s570 = smul.addr %s569, 8
      %s571 = scalar_lea.vmem %s4, %s570
      %p572 = scmp.lt.s32.totalorder %s21, 0
      %s573 = scalar_select %p572, %s21, 0
      %s574 = smul.addr %s573, 8
      %s575 = scalar_lea.vmem %s5, %s574
      // Predicated region
      $region37: #{conv_block_forward.2} parent=31 // pred_check
        %p576 = pneg %p127
      $region38: #{conv_block_forward.2} parent=31 // pred_check_branch
        %578 = sbr.rel (%p576) target = $region40
      $region39: #{conv_block_forward.2} parent=31 // pred_region
        %s579 = smul.u32 2, %s22
      $region40: #{conv_block_forward.2} parent=31 // pred_fallthru
        _
      // Predicated region
      $region41: #{conv_block_forward.2} parent=31 // pred_check
        %p580 = pneg %p153
      $region42: #{conv_block_forward.2} parent=31 // pred_check_branch
        %582 = sbr.rel (%p580) target = $region44
      $region43: #{conv_block_forward.2} parent=31 // pred_region
        _
      $region44: #{conv_block_forward.2} parent=31 // pred_fallthru
        _
      // Predicated region
      $region45: #{conv_block_forward.2} parent=31 // pred_check
        %p583 = pneg %p179
      $region46: #{conv_block_forward.2} parent=31 // pred_check_branch
        %585 = sbr.rel (%p583) target = $region48
      $region47: #{conv_block_forward.2} parent=31 // pred_region
        _
      $region48: #{conv_block_forward.2} parent=31 // pred_fallthru
        _
      // Predicated region
      $region49: #{conv_block_forward.2} parent=31 // pred_check
        %p586 = pneg %p153
      $region50: #{conv_block_forward.2} parent=31 // pred_check_branch
        %588 = sbr.rel (%p586) target = $region52
      $region51: #{conv_block_forward.2} parent=31 // pred_region
        %p589 = scmp.lt.s32.totalorder %s21, 0
        %s590 = scalar_select %p589, %s21, 0
        %s591 = smul.addr %s590, 8
        %s592 = scalar_lea.vmem %s4, %s591
      $region52: #{conv_block_forward.2} parent=31 // pred_fallthru
        _
      // Predicated region
      $region53: #{conv_block_forward.2} parent=31 // pred_check
        %p593 = pneg %p179
      $region54: #{conv_block_forward.2} parent=31 // pred_check_branch
        %595 = sbr.rel (%p593) target = $region56
      $region55: #{conv_block_forward.2} parent=31 // pred_region
        %p596 = scmp.lt.s32.totalorder %s21, 0
        %s597 = scalar_select %p596, %s21, 0
        %s598 = smul.addr %s597, 8
        %s599 = scalar_lea.vmem %s5, %s598
      $region56: #{conv_block_forward.2} parent=31 // pred_fallthru
        _
    $region32: #{conv_block_forward.2} parent=5 // pred_fallthru
      _
    %p600 = scmp.le.s32.totalorder 2, %s12
    // Predicated region
    $region57: #{conv_block_forward.2} parent=5 // pred_check
      %p601 = pneg %p600
    $region58: #{conv_block_forward.2} parent=5 // pred_check_branch
      %603 = sbr.rel (%p601) target = $region60
    $region59: #{conv_block_forward.2} parent=5 // pred_region
      %s604 = ssub.s32 %s12, 2
      // Predicated region
      $region61: #{conv_block_forward.2} parent=59 // pred_check
        %p605 = pneg %p133
      $region62: #{conv_block_forward.2} parent=59 // pred_check_branch
        %607 = sbr.rel (%p605) target = $region64
      $region63: #{conv_block_forward.2} parent=59 // pred_region
        %s608 = smul.u32 2, %s24
        %p609 = scmp.lt.s32.totalorder %s23, 0
        %s610 = scalar_select %p609, %s23, 0
        %p611 = scmp.lt.s32.totalorder %s608, 5
        %s612 = scalar_select %p611, %s608, 5
        %s613 = smul.addr %s610, 6
        %s614 = sadd.s32 %s612, %s613
        %s615 = smul.addr %s614, 8
        %s616 = scalar_lea.vmem %s3, %s615
      $region64: #{conv_block_forward.2} parent=59 // pred_fallthru
        _
    $region60: #{conv_block_forward.2} parent=5 // pred_fallthru
      _
  $region6: #{conv_block_forward.2} parent=0 // loop_footer
    %s16 = sadd.s32 1, %s12
  $region7: #{conv_block_forward.2} parent=0 // loop_footer_branch
    %11 = sbr.rel target = $region3
  $region8: #{conv_block_forward.2} parent=0 // loop_exit
    _

</llo_original>
